<compile_context>
chip_gen: v7x
topology: tpu7x:2x2x1
jax: 0.10.0
libtpu: 0.0.40
codegen_flags: <defaults>
</compile_context>

<pallas_src>
import jax
import jax.numpy as jnp
from jax import lax
from jax.experimental import pallas as pl
from jax.experimental.pallas import tpu as pltpu

CIN, COUT, KH, KW = 3, 64, 3, 3
K = KH * KW * CIN            # 27 contraction entries, ordered (kh, kw, c)
KPAD = 32                    # contraction dim padded to a sublane multiple (NOT 128)


def _round_up(v, m):
    return -(-v // m) * m


def _pick_row_tile(oh, w, *, lane_cap=2048, max_rows=64):
    """Output rows per grid step: the whole output in one tile when it is small
    (lane-dense flat output), otherwise a multiple of 8 capped so the accumulator,
    the unrolled extraction loop and the VMEM working set stay small."""
    if oh * w <= lane_cap and oh <= max_rows:
        return oh
    th = (lane_cap // w) // 8 * 8
    th = min(max(th, 8), max_rows)
    return oh if th >= oh else th


def _make_conv_kernel(th, w, ow, tq_pad, flat_out, hoist_fill):
    def kernel(x_ref, w_ref, b_ref, o_ref, slab_ref):
        # x_ref:    (1, 1, CIN, hpad)  halo'd row tile of the flattened image
        # w_ref:    (COUT, KPAD)       weights, columns ordered (kh, kw, c), zero padded
        # b_ref:    (COUT, 1)          bias
        # o_ref:    (1, COUT, OH*OW)   if flat_out else (1, COUT, th, OW)
        # slab_ref: (KPAD, tq_pad)     on-chip im2col slab (never touches HBM)

        def zero_pad_rows():
            # Keep the K-padding rows zeroed so the zero weight columns never multiply
            # uninitialised scratch garbage.
            slab_ref[pl.ds(K, KPAD - K), :] = jnp.zeros(
                (KPAD - K, tq_pad), slab_ref.dtype)

        if hoist_fill:
            # Row-tile axis is "arbitrary" (never split across cores), so every core
            # starts its per-image loop at r == 0; rows K..KPAD-1 are never
            # overwritten afterwards and stay zero for all later steps.
            @pl.when(pl.program_id(1) == 0)
            def _():
                zero_pad_rows()
        else:
            zero_pad_rows()

        # Build the im2col slab from 9 contiguous (CIN, tq_pad) slices: patch row
        # (kh, kw, c) for flat in-tile position q is x_flat[c, q + kh*W + kw].
        for kh in range(KH):
            for kw in range(KW):
                idx = (kh * KW + kw) * CIN
                chunk = x_ref[0, 0, :, pl.ds(kh * w + kw, tq_pad)]
                slab_ref[pl.ds(idx, CIN), :] = chunk.astype(slab_ref.dtype)

        # (COUT, KPAD) @ (KPAD, tq_pad) on the MXU, f32 accumulation, then bias.
        acc = jnp.dot(w_ref[...], slab_ref[...],
                      preferred_element_type=jnp.float32) + b_ref[...]

        # Drop the KW-1 wrapped "garbage" columns of every output row while copying
        # into the output block (dense (COUT, OH*OW) slab in the flat case).
        for t in range(th):
            row = acc[:, t * w:t * w + ow].astype(o_ref.dtype)
            if flat_out:
                o_ref[0, :, pl.ds(t * ow, ow)] = row
            else:
                o_ref[0, :, t, :] = row

    return kernel


def yefeiji_forward(x, weight, bias, *, row_tile=None, compute_dtype=jnp.float32):
    """x: (N, 3, H, W); weight: (64, 3, 3, 3) OIHW; bias: (64,) -> (N, 64, OH, OW).

    compute_dtype=jnp.bfloat16 trades ~1e-3 accuracy for 2-4x MXU throughput (v6e/v7x).
    """
    n, cin, h, w = x.shape
    assert cin == CIN and weight.shape == (COUT, CIN, KH, KW) and bias.shape == (COUT,)
    oh, ow = h - KH + 1, w - KW + 1

    th = row_tile if row_tile is not None else _pick_row_tile(oh, w)
    r_tiles = pl.cdiv(oh, th)
    flat_out = r_tiles == 1                    # whole output of one image in one tile
    tq = th * w                                # flat lanes produced per grid step
    tq_pad = _round_up(tq, 128)                # slab lane dim, 128-aligned
    hpad = _round_up(tq_pad + (KH - 1) * w + (KW - 1), 128)

    # ---- wrapper-side layout plumbing (cheap: input is ~21x smaller than output) ----
    # Flatten (H, W) and materialise overlapping halo'd row tiles so a plain BlockSpec
    # can pipeline them; VMEM use becomes independent of the image resolution.
    lpad = (r_tiles - 1) * tq + hpad
    x_flat = jnp.pad(x.reshape(n, CIN, h * w), ((0, 0), (0, 0), (0, lpad - h * w)))
    x_halo = jnp.stack([x_flat[:, :, r * tq:r * tq + hpad] for r in range(r_tiles)],
                       axis=1)                                 # (N, r_tiles, CIN, hpad)

    # Weight columns reordered to (kh, kw, c) so the slab fills with contiguous
    # (CIN, tq) slices; zero-pad the contraction dim 27 -> 32.
    w2 = jnp.transpose(weight, (0, 2, 3, 1)).reshape(COUT, K)
    w2 = jnp.pad(w2, ((0, 0), (0, KPAD - K))).astype(compute_dtype)
    b2 = bias.reshape(COUT, 1).astype(jnp.float32)

    if flat_out:
        out_shape = jax.ShapeDtypeStruct((n, COUT, oh * ow), x.dtype)
        out_spec = pl.BlockSpec((1, COUT, oh * ow), lambda i, r: (i, 0, 0))
        out_lane_bytes = _round_up(oh * ow, 128) * 4
    else:
        out_shape = jax.ShapeDtypeStruct((n, COUT, oh, ow), x.dtype)
        out_spec = pl.BlockSpec((1, COUT, th, ow), lambda i, r: (i, 0, r, 0))
        out_lane_bytes = th * _round_up(ow, 128) * 4

    # Megacore: shard the batch axis when possible; otherwise let the row-tile axis be
    # split (and then the K-padding zero fill cannot be hoisted to r == 0).
    hoist_fill = not (n == 1 and r_tiles > 1)
    dim_sem = ("parallel", "arbitrary") if hoist_fill else ("arbitrary", "parallel")

    # Explicit VMEM budget from the actual block/scratch footprint (plus headroom for
    # the (COUT, tq_pad) f32 accumulator); stays well below v7x's 64 MiB.
    itemsize = jnp.dtype(compute_dtype).itemsize
    est = (2 * 8 * hpad * 4                        # double-buffered halo'd input tiles
           + 2 * COUT * 128 * (itemsize + 4)       # weight + bias blocks
           + 2 * COUT * out_lane_bytes             # double-buffered output blocks
           + KPAD * tq_pad * itemsize              # im2col slab scratch
           + 4 * COUT * tq_pad * 4)                # accumulator / extraction headroom
    vmem_limit = int(min(48 * 2 ** 20, max(16 * 2 ** 20, 2 * est)))

    kernel = _make_conv_kernel(th, w, ow, tq_pad, flat_out, hoist_fill)
    out = pl.pallas_call(
        kernel,
        out_shape=out_shape,
        grid_spec=pltpu.PrefetchScalarGridSpec(
            num_scalar_prefetch=0,
            grid=(n, r_tiles),
            in_specs=[
                pl.BlockSpec((1, 1, CIN, hpad), lambda i, r: (i, r, 0, 0)),
                pl.BlockSpec((COUT, KPAD), lambda i, r: (0, 0)),   # shared weights
                pl.BlockSpec((COUT, 1), lambda i, r: (0, 0)),      # shared bias
            ],
            out_specs=out_spec,
            scratch_shapes=[pltpu.VMEM((KPAD, tq_pad), compute_dtype)],
        ),
        compiler_params=pltpu.CompilerParams(
            dimension_semantics=dim_sem, vmem_limit_bytes=vmem_limit),
    )(x_halo, w2, b2)

    return out.reshape(n, COUT, oh, ow) if flat_out else out


if __name__ == "__main__":
    key = jax.random.PRNGKey(0)
    kx, kw_key, kb = jax.random.split(key, 3)

    # Small deterministic example consistent with Conv2d(3, 64, 3): NCHW input.
    x = jax.random.normal(kx, (2, CIN, 16, 16), dtype=jnp.float32)
    weight = 0.1 * jax.random.normal(kw_key, (COUT, CIN, KH, KW), dtype=jnp.float32)
    bias = 0.1 * jax.random.normal(kb, (COUT,), dtype=jnp.float32)

    y = jax.block_until_ready(yefeiji_forward(x, weight, bias))
    assert y.shape == (2, COUT, 14, 14), y.shape

    # Sanity check against the XLA convolution reference (full-precision reference).
    y_ref = lax.conv_general_dilated(
        x, weight, window_strides=(1, 1), padding="VALID",
        dimension_numbers=("NCHW", "OIHW", "NCHW"),
        precision=lax.Precision.HIGHEST,
    ) + bias[None, :, None, None]
    y_ref = jax.block_until_ready(y_ref)
    err = float(jnp.max(jnp.abs(y - y_ref)))
    assert jnp.allclose(y, y_ref, rtol=1e-4, atol=1e-4), err

    print("KERNEL_OK")
</pallas_src>

<mosaic_0001>
module attributes {stable_mosaic.version = 11 : i64} {
  func.func @kernel(%arg0: i32, %arg1: i32, %arg2: memref<1x1x3x384xf32, #tpu.memory_space<vmem>>, %arg3: memref<64x32xf32, #tpu.memory_space<vmem>>, %arg4: memref<64x1xf32, #tpu.memory_space<vmem>>, %arg5: memref<1x64x196xf32, #tpu.memory_space<vmem>>, %arg6: memref<32x256xf32, #tpu.memory_space<vmem>>) attributes {dimension_semantics = [#tpu.dimension_semantics<parallel>, #tpu.dimension_semantics<arbitrary>], iteration_bounds = array<i64: 2, 1>, scalar_prefetch = 0 : i64, scratch_operands = 1 : i64, tpu.core_type = #tpu.core_type<tc>, window_params = [{transform_indices = @transform_0, window_bounds = array<i64: 1, 1, 3, 384>}, {pipeline_mode = #tpu.pipeline_mode<synchronous>, transform_indices = @transform_1, window_bounds = array<i64: 64, 32>}, {pipeline_mode = #tpu.pipeline_mode<synchronous>, transform_indices = @transform_2, window_bounds = array<i64: 64, 1>}, {transform_indices = @transform_3, window_bounds = array<i64: 1, 64, 196>}]} {
    %c0_i32 = arith.constant 0 : i32
    %0 = arith.cmpi eq, %arg1, %c0_i32 : i32
    %1 = arith.extui %0 : i1 to i32
    %c0_i32_0 = arith.constant 0 : i32
    %2 = arith.cmpi ne, %1, %c0_i32_0 : i32
    scf.if %2 {
      %cst_74 = arith.constant 0.000000e+00 : f32
      %92 = vector.broadcast %cst_74 : f32 to vector<5x256xf32>
      %c27 = arith.constant 27 : index
      %c0_75 = arith.constant 0 : index
      %93 = vector.load %arg6[%c27, %c0_75] : memref<32x256xf32, #tpu.memory_space<vmem>>, vector<5x256xf32>
      tpu.vector_store %arg6[%c27, %c0_75], %92 {strides = array<i32>} : memref<32x256xf32, #tpu.memory_space<vmem>>, vector<5x256xf32>,
    } else {
    }
    %c0 = arith.constant 0 : index
    %c0_1 = arith.constant 0 : index
    %c0_2 = arith.constant 0 : index
    %c0_3 = arith.constant 0 : index
    %3 = vector.load %arg2[%c0, %c0_1, %c0_2, %c0_3] : memref<1x1x3x384xf32, #tpu.memory_space<vmem>>, vector<1x1x3x256xf32>
    %4 = vector.shape_cast %3 : vector<1x1x3x256xf32> to vector<3x256xf32>
    %c0_4 = arith.constant 0 : index
    %c0_5 = arith.constant 0 : index
    %5 = vector.load %arg6[%c0_4, %c0_5] : memref<32x256xf32, #tpu.memory_space<vmem>>, vector<3x256xf32>
    tpu.vector_store %arg6[%c0_4, %c0_5], %4 {strides = array<i32>} : memref<32x256xf32, #tpu.memory_space<vmem>>, vector<3x256xf32>,
    %c0_6 = arith.constant 0 : index
    %c0_7 = arith.constant 0 : index
    %c0_8 = arith.constant 0 : index
    %c1 = arith.constant 1 : index
    %6 = vector.load %arg2[%c0_6, %c0_7, %c0_8, %c1] : memref<1x1x3x384xf32, #tpu.memory_space<vmem>>, vector<1x1x3x256xf32>
    %7 = vector.shape_cast %6 : vector<1x1x3x256xf32> to vector<3x256xf32>
    %c3 = arith.constant 3 : index
    %c0_9 = arith.constant 0 : index
    %8 = vector.load %arg6[%c3, %c0_9] : memref<32x256xf32, #tpu.memory_space<vmem>>, vector<3x256xf32>
    tpu.vector_store %arg6[%c3, %c0_9], %7 {strides = array<i32>} : memref<32x256xf32, #tpu.memory_space<vmem>>, vector<3x256xf32>,
    %c0_10 = arith.constant 0 : index
    %c0_11 = arith.constant 0 : index
    %c0_12 = arith.constant 0 : index
    %c2 = arith.constant 2 : index
    %9 = vector.load %arg2[%c0_10, %c0_11, %c0_12, %c2] : memref<1x1x3x384xf32, #tpu.memory_space<vmem>>, vector<1x1x3x256xf32>
    %10 = vector.shape_cast %9 : vector<1x1x3x256xf32> to vector<3x256xf32>
    %c6 = arith.constant 6 : index
    %c0_13 = arith.constant 0 : index
    %11 = vector.load %arg6[%c6, %c0_13] : memref<32x256xf32, #tpu.memory_space<vmem>>, vector<3x256xf32>
    tpu.vector_store %arg6[%c6, %c0_13], %10 {strides = array<i32>} : memref<32x256xf32, #tpu.memory_space<vmem>>, vector<3x256xf32>,
    %c0_14 = arith.constant 0 : index
    %c0_15 = arith.constant 0 : index
    %c0_16 = arith.constant 0 : index
    %c16 = arith.constant 16 : index
    %12 = vector.load %arg2[%c0_14, %c0_15, %c0_16, %c16] : memref<1x1x3x384xf32, #tpu.memory_space<vmem>>, vector<1x1x3x256xf32>
    %13 = vector.shape_cast %12 : vector<1x1x3x256xf32> to vector<3x256xf32>
    %c9 = arith.constant 9 : index
    %c0_17 = arith.constant 0 : index
    %14 = vector.load %arg6[%c9, %c0_17] : memref<32x256xf32, #tpu.memory_space<vmem>>, vector<3x256xf32>
    tpu.vector_store %arg6[%c9, %c0_17], %13 {strides = array<i32>} : memref<32x256xf32, #tpu.memory_space<vmem>>, vector<3x256xf32>,
    %c0_18 = arith.constant 0 : index
    %c0_19 = arith.constant 0 : index
    %c0_20 = arith.constant 0 : index
    %c17 = arith.constant 17 : index
    %15 = vector.load %arg2[%c0_18, %c0_19, %c0_20, %c17] : memref<1x1x3x384xf32, #tpu.memory_space<vmem>>, vector<1x1x3x256xf32>
    %16 = vector.shape_cast %15 : vector<1x1x3x256xf32> to vector<3x256xf32>
    %c12 = arith.constant 12 : index
    %c0_21 = arith.constant 0 : index
    %17 = vector.load %arg6[%c12, %c0_21] : memref<32x256xf32, #tpu.memory_space<vmem>>, vector<3x256xf32>
    tpu.vector_store %arg6[%c12, %c0_21], %16 {strides = array<i32>} : memref<32x256xf32, #tpu.memory_space<vmem>>, vector<3x256xf32>,
    %c0_22 = arith.constant 0 : index
    %c0_23 = arith.constant 0 : index
    %c0_24 = arith.constant 0 : index
    %c18 = arith.constant 18 : index
    %18 = vector.load %arg2[%c0_22, %c0_23, %c0_24, %c18] : memref<1x1x3x384xf32, #tpu.memory_space<vmem>>, vector<1x1x3x256xf32>
    %19 = vector.shape_cast %18 : vector<1x1x3x256xf32> to vector<3x256xf32>
    %c15 = arith.constant 15 : index
    %c0_25 = arith.constant 0 : index
    %20 = vector.load %arg6[%c15, %c0_25] : memref<32x256xf32, #tpu.memory_space<vmem>>, vector<3x256xf32>
    tpu.vector_store %arg6[%c15, %c0_25], %19 {strides = array<i32>} : memref<32x256xf32, #tpu.memory_space<vmem>>, vector<3x256xf32>,
    %c0_26 = arith.constant 0 : index
    %c0_27 = arith.constant 0 : index
    %c0_28 = arith.constant 0 : index
    %c32 = arith.constant 32 : index
    %21 = vector.load %arg2[%c0_26, %c0_27, %c0_28, %c32] : memref<1x1x3x384xf32, #tpu.memory_space<vmem>>, vector<1x1x3x256xf32>
    %22 = vector.shape_cast %21 : vector<1x1x3x256xf32> to vector<3x256xf32>
    %c18_29 = arith.constant 18 : index
    %c0_30 = arith.constant 0 : index
    %23 = vector.load %arg6[%c18_29, %c0_30] : memref<32x256xf32, #tpu.memory_space<vmem>>, vector<3x256xf32>
    tpu.vector_store %arg6[%c18_29, %c0_30], %22 {strides = array<i32>} : memref<32x256xf32, #tpu.memory_space<vmem>>, vector<3x256xf32>,
    %c0_31 = arith.constant 0 : index
    %c0_32 = arith.constant 0 : index
    %c0_33 = arith.constant 0 : index
    %c33 = arith.constant 33 : index
    %24 = vector.load %arg2[%c0_31, %c0_32, %c0_33, %c33] : memref<1x1x3x384xf32, #tpu.memory_space<vmem>>, vector<1x1x3x256xf32>
    %25 = vector.shape_cast %24 : vector<1x1x3x256xf32> to vector<3x256xf32>
    %c21 = arith.constant 21 : index
    %c0_34 = arith.constant 0 : index
    %26 = vector.load %arg6[%c21, %c0_34] : memref<32x256xf32, #tpu.memory_space<vmem>>, vector<3x256xf32>
    tpu.vector_store %arg6[%c21, %c0_34], %25 {strides = array<i32>} : memref<32x256xf32, #tpu.memory_space<vmem>>, vector<3x256xf32>,
    %c0_35 = arith.constant 0 : index
    %c0_36 = arith.constant 0 : index
    %c0_37 = arith.constant 0 : index
    %c34 = arith.constant 34 : index
    %27 = vector.load %arg2[%c0_35, %c0_36, %c0_37, %c34] : memref<1x1x3x384xf32, #tpu.memory_space<vmem>>, vector<1x1x3x256xf32>
    %28 = vector.shape_cast %27 : vector<1x1x3x256xf32> to vector<3x256xf32>
    %c24 = arith.constant 24 : index
    %c0_38 = arith.constant 0 : index
    %29 = vector.load %arg6[%c24, %c0_38] : memref<32x256xf32, #tpu.memory_space<vmem>>, vector<3x256xf32>
    tpu.vector_store %arg6[%c24, %c0_38], %28 {strides = array<i32>} : memref<32x256xf32, #tpu.memory_space<vmem>>, vector<3x256xf32>,
    %c0_39 = arith.constant 0 : index
    %c0_40 = arith.constant 0 : index
    %30 = vector.load %arg3[%c0_39, %c0_40] : memref<64x32xf32, #tpu.memory_space<vmem>>, vector<64x32xf32>
    %c0_41 = arith.constant 0 : index
    %c0_42 = arith.constant 0 : index
    %31 = vector.load %arg6[%c0_41, %c0_42] : memref<32x256xf32, #tpu.memory_space<vmem>>, vector<32x256xf32>
    %cst = arith.constant dense<0.000000e+00> : vector<64x256xf32>
    %32 = tpu.matmul %30, %31, %cst {dimension_numbers = #tpu.dot_dimension_numbers<[1], [0], [0], [1], [0, 0, 1, 1], [], []>} : vector<64x32xf32>, vector<32x256xf32>, vector<64x256xf32> -> vector<64x256xf32>
    %c0_43 = arith.constant 0 : index
    %c0_44 = arith.constant 0 : index
    %33 = vector.load %arg4[%c0_43, %c0_44] : memref<64x1xf32, #tpu.memory_space<vmem>>, vector<64x1xf32>
    %34 = vector.broadcast %33 : vector<64x1xf32> to vector<64x256xf32>
    %35 = arith.addf %32, %34 : vector<64x256xf32>
    %36 = vector.extract_strided_slice %35 {offsets = [0, 0], sizes = [64, 14], strides = [1, 1]} : vector<64x256xf32> to vector<64x14xf32>
    %c0_45 = arith.constant 0 : index
    %c0_46 = arith.constant 0 : index
    %c0_47 = arith.constant 0 : index
    %37 = vector.load %arg5[%c0_45, %c0_46, %c0_47] : memref<1x64x196xf32, #tpu.memory_space<vmem>>, vector<1x64x14xf32>
    %38 = vector.shape_cast %37 : vector<1x64x14xf32> to vector<64x14xf32>
    %39 = vector.shape_cast %36 : vector<64x14xf32> to vector<1x64x14xf32>
    tpu.vector_store %arg5[%c0_45, %c0_46, %c0_47], %39 {strides = array<i32>} : memref<1x64x196xf32, #tpu.memory_space<vmem>>, vector<1x64x14xf32>,
    %40 = vector.extract_strided_slice %35 {offsets = [0, 16], sizes = [64, 14], strides = [1, 1]} : vector<64x256xf32> to vector<64x14xf32>
    %c0_48 = arith.constant 0 : index
    %c0_49 = arith.constant 0 : index
    %c14 = arith.constant 14 : index
    %41 = vector.load %arg5[%c0_48, %c0_49, %c14] : memref<1x64x196xf32, #tpu.memory_space<vmem>>, vector<1x64x14xf32>
    %42 = vector.shape_cast %41 : vector<1x64x14xf32> to vector<64x14xf32>
    %43 = vector.shape_cast %40 : vector<64x14xf32> to vector<1x64x14xf32>
    tpu.vector_store %arg5[%c0_48, %c0_49, %c14], %43 {strides = array<i32>} : memref<1x64x196xf32, #tpu.memory_space<vmem>>, vector<1x64x14xf32>,
    %44 = vector.extract_strided_slice %35 {offsets = [0, 32], sizes = [64, 14], strides = [1, 1]} : vector<64x256xf32> to vector<64x14xf32>
    %c0_50 = arith.constant 0 : index
    %c0_51 = arith.constant 0 : index
    %c28 = arith.constant 28 : index
    %45 = vector.load %arg5[%c0_50, %c0_51, %c28] : memref<1x64x196xf32, #tpu.memory_space<vmem>>, vector<1x64x14xf32>
    %46 = vector.shape_cast %45 : vector<1x64x14xf32> to vector<64x14xf32>
    %47 = vector.shape_cast %44 : vector<64x14xf32> to vector<1x64x14xf32>
    tpu.vector_store %arg5[%c0_50, %c0_51, %c28], %47 {strides = array<i32>} : memref<1x64x196xf32, #tpu.memory_space<vmem>>, vector<1x64x14xf32>,
    %48 = vector.extract_strided_slice %35 {offsets = [0, 48], sizes = [64, 14], strides = [1, 1]} : vector<64x256xf32> to vector<64x14xf32>
    %c0_52 = arith.constant 0 : index
    %c0_53 = arith.constant 0 : index
    %c42 = arith.constant 42 : index
    %49 = vector.load %arg5[%c0_52, %c0_53, %c42] : memref<1x64x196xf32, #tpu.memory_space<vmem>>, vector<1x64x14xf32>
    %50 = vector.shape_cast %49 : vector<1x64x14xf32> to vector<64x14xf32>
    %51 = vector.shape_cast %48 : vector<64x14xf32> to vector<1x64x14xf32>
    tpu.vector_store %arg5[%c0_52, %c0_53, %c42], %51 {strides = array<i32>} : memref<1x64x196xf32, #tpu.memory_space<vmem>>, vector<1x64x14xf32>,
    %52 = vector.extract_strided_slice %35 {offsets = [0, 64], sizes = [64, 14], strides = [1, 1]} : vector<64x256xf32> to vector<64x14xf32>
    %c0_54 = arith.constant 0 : index
    %c0_55 = arith.constant 0 : index
    %c56 = arith.constant 56 : index
    %53 = vector.load %arg5[%c0_54, %c0_55, %c56] : memref<1x64x196xf32, #tpu.memory_space<vmem>>, vector<1x64x14xf32>
    %54 = vector.shape_cast %53 : vector<1x64x14xf32> to vector<64x14xf32>
    %55 = vector.shape_cast %52 : vector<64x14xf32> to vector<1x64x14xf32>
    tpu.vector_store %arg5[%c0_54, %c0_55, %c56], %55 {strides = array<i32>} : memref<1x64x196xf32, #tpu.memory_space<vmem>>, vector<1x64x14xf32>,
    %56 = vector.extract_strided_slice %35 {offsets = [0, 80], sizes = [64, 14], strides = [1, 1]} : vector<64x256xf32> to vector<64x14xf32>
    %c0_56 = arith.constant 0 : index
    %c0_57 = arith.constant 0 : index
    %c70 = arith.constant 70 : index
    %57 = vector.load %arg5[%c0_56, %c0_57, %c70] : memref<1x64x196xf32, #tpu.memory_space<vmem>>, vector<1x64x14xf32>
    %58 = vector.shape_cast %57 : vector<1x64x14xf32> to vector<64x14xf32>
    %59 = vector.shape_cast %56 : vector<64x14xf32> to vector<1x64x14xf32>
    tpu.vector_store %arg5[%c0_56, %c0_57, %c70], %59 {strides = array<i32>} : memref<1x64x196xf32, #tpu.memory_space<vmem>>, vector<1x64x14xf32>,
    %60 = vector.extract_strided_slice %35 {offsets = [0, 96], sizes = [64, 14], strides = [1, 1]} : vector<64x256xf32> to vector<64x14xf32>
    %c0_58 = arith.constant 0 : index
    %c0_59 = arith.constant 0 : index
    %c84 = arith.constant 84 : index
    %61 = vector.load %arg5[%c0_58, %c0_59, %c84] : memref<1x64x196xf32, #tpu.memory_space<vmem>>, vector<1x64x14xf32>
    %62 = vector.shape_cast %61 : vector<1x64x14xf32> to vector<64x14xf32>
    %63 = vector.shape_cast %60 : vector<64x14xf32> to vector<1x64x14xf32>
    tpu.vector_store %arg5[%c0_58, %c0_59, %c84], %63 {strides = array<i32>} : memref<1x64x196xf32, #tpu.memory_space<vmem>>, vector<1x64x14xf32>,
    %64 = vector.extract_strided_slice %35 {offsets = [0, 112], sizes = [64, 14], strides = [1, 1]} : vector<64x256xf32> to vector<64x14xf32>
    %c0_60 = arith.constant 0 : index
    %c0_61 = arith.constant 0 : index
    %c98 = arith.constant 98 : index
    %65 = vector.load %arg5[%c0_60, %c0_61, %c98] : memref<1x64x196xf32, #tpu.memory_space<vmem>>, vector<1x64x14xf32>
    %66 = vector.shape_cast %65 : vector<1x64x14xf32> to vector<64x14xf32>
    %67 = vector.shape_cast %64 : vector<64x14xf32> to vector<1x64x14xf32>
    tpu.vector_store %arg5[%c0_60, %c0_61, %c98], %67 {strides = array<i32>} : memref<1x64x196xf32, #tpu.memory_space<vmem>>, vector<1x64x14xf32>,
    %68 = vector.extract_strided_slice %35 {offsets = [0, 128], sizes = [64, 14], strides = [1, 1]} : vector<64x256xf32> to vector<64x14xf32>
    %c0_62 = arith.constant 0 : index
    %c0_63 = arith.constant 0 : index
    %c112 = arith.constant 112 : index
    %69 = vector.load %arg5[%c0_62, %c0_63, %c112] : memref<1x64x196xf32, #tpu.memory_space<vmem>>, vector<1x64x14xf32>
    %70 = vector.shape_cast %69 : vector<1x64x14xf32> to vector<64x14xf32>
    %71 = vector.shape_cast %68 : vector<64x14xf32> to vector<1x64x14xf32>
    tpu.vector_store %arg5[%c0_62, %c0_63, %c112], %71 {strides = array<i32>} : memref<1x64x196xf32, #tpu.memory_space<vmem>>, vector<1x64x14xf32>,
    %72 = vector.extract_strided_slice %35 {offsets = [0, 144], sizes = [64, 14], strides = [1, 1]} : vector<64x256xf32> to vector<64x14xf32>
    %c0_64 = arith.constant 0 : index
    %c0_65 = arith.constant 0 : index
    %c126 = arith.constant 126 : index
    %73 = vector.load %arg5[%c0_64, %c0_65, %c126] : memref<1x64x196xf32, #tpu.memory_space<vmem>>, vector<1x64x14xf32>
    %74 = vector.shape_cast %73 : vector<1x64x14xf32> to vector<64x14xf32>
    %75 = vector.shape_cast %72 : vector<64x14xf32> to vector<1x64x14xf32>
    tpu.vector_store %arg5[%c0_64, %c0_65, %c126], %75 {strides = array<i32>} : memref<1x64x196xf32, #tpu.memory_space<vmem>>, vector<1x64x14xf32>,
    %76 = vector.extract_strided_slice %35 {offsets = [0, 160], sizes = [64, 14], strides = [1, 1]} : vector<64x256xf32> to vector<64x14xf32>
    %c0_66 = arith.constant 0 : index
    %c0_67 = arith.constant 0 : index
    %c140 = arith.constant 140 : index
    %77 = vector.load %arg5[%c0_66, %c0_67, %c140] : memref<1x64x196xf32, #tpu.memory_space<vmem>>, vector<1x64x14xf32>
    %78 = vector.shape_cast %77 : vector<1x64x14xf32> to vector<64x14xf32>
    %79 = vector.shape_cast %76 : vector<64x14xf32> to vector<1x64x14xf32>
    tpu.vector_store %arg5[%c0_66, %c0_67, %c140], %79 {strides = array<i32>} : memref<1x64x196xf32, #tpu.memory_space<vmem>>, vector<1x64x14xf32>,
    %80 = vector.extract_strided_slice %35 {offsets = [0, 176], sizes = [64, 14], strides = [1, 1]} : vector<64x256xf32> to vector<64x14xf32>
    %c0_68 = arith.constant 0 : index
    %c0_69 = arith.constant 0 : index
    %c154 = arith.constant 154 : index
    %81 = vector.load %arg5[%c0_68, %c0_69, %c154] : memref<1x64x196xf32, #tpu.memory_space<vmem>>, vector<1x64x14xf32>
    %82 = vector.shape_cast %81 : vector<1x64x14xf32> to vector<64x14xf32>
    %83 = vector.shape_cast %80 : vector<64x14xf32> to vector<1x64x14xf32>
    tpu.vector_store %arg5[%c0_68, %c0_69, %c154], %83 {strides = array<i32>} : memref<1x64x196xf32, #tpu.memory_space<vmem>>, vector<1x64x14xf32>,
    %84 = vector.extract_strided_slice %35 {offsets = [0, 192], sizes = [64, 14], strides = [1, 1]} : vector<64x256xf32> to vector<64x14xf32>
    %c0_70 = arith.constant 0 : index
    %c0_71 = arith.constant 0 : index
    %c168 = arith.constant 168 : index
    %85 = vector.load %arg5[%c0_70, %c0_71, %c168] : memref<1x64x196xf32, #tpu.memory_space<vmem>>, vector<1x64x14xf32>
    %86 = vector.shape_cast %85 : vector<1x64x14xf32> to vector<64x14xf32>
    %87 = vector.shape_cast %84 : vector<64x14xf32> to vector<1x64x14xf32>
    tpu.vector_store %arg5[%c0_70, %c0_71, %c168], %87 {strides = array<i32>} : memref<1x64x196xf32, #tpu.memory_space<vmem>>, vector<1x64x14xf32>,
    %88 = vector.extract_strided_slice %35 {offsets = [0, 208], sizes = [64, 14], strides = [1, 1]} : vector<64x256xf32> to vector<64x14xf32>
    %c0_72 = arith.constant 0 : index
    %c0_73 = arith.constant 0 : index
    %c182 = arith.constant 182 : index
    %89 = vector.load %arg5[%c0_72, %c0_73, %c182] : memref<1x64x196xf32, #tpu.memory_space<vmem>>, vector<1x64x14xf32>
    %90 = vector.shape_cast %89 : vector<1x64x14xf32> to vector<64x14xf32>
    %91 = vector.shape_cast %88 : vector<64x14xf32> to vector<1x64x14xf32>
    tpu.vector_store %arg5[%c0_72, %c0_73, %c182], %91 {strides = array<i32>} : memref<1x64x196xf32, #tpu.memory_space<vmem>>, vector<1x64x14xf32>,
    return
  }
  func.func @transform_0(%arg0: i32, %arg1: i32) -> (i32, i32, i32, i32) {
    %c0_i32 = arith.constant 0 : i32
    %c0_i32_0 = arith.constant 0 : i32
    %c0_i32_1 = arith.constant 0 : i32
    return %arg0, %arg1, %c0_i32, %c0_i32_0 : i32, i32, i32, i32
  }
  func.func @transform_1(%arg0: i32, %arg1: i32) -> (i32, i32) {
    %c0_i32 = arith.constant 0 : i32
    %c0_i32_0 = arith.constant 0 : i32
    %c0_i32_1 = arith.constant 0 : i32
    return %c0_i32, %c0_i32_0 : i32, i32
  }
  func.func @transform_2(%arg0: i32, %arg1: i32) -> (i32, i32) {
    %c0_i32 = arith.constant 0 : i32
    %c0_i32_0 = arith.constant 0 : i32
    %c0_i32_1 = arith.constant 0 : i32
    return %c0_i32, %c0_i32_0 : i32, i32
  }
  func.func @transform_3(%arg0: i32, %arg1: i32) -> (i32, i32, i32) {
    %c0_i32 = arith.constant 0 : i32
    %c0_i32_0 = arith.constant 0 : i32
    %c0_i32_1 = arith.constant 0 : i32
    return %arg0, %c0_i32, %c0_i32_0 : i32, i32, i32
  }
}

</mosaic_0001>

<llo_original>
// kernel: tpu_custom_call.1
$region0: #{tpu_custom_call.1}
  #allocation0 [shape = 'u32[]', space=smem, size = 0x4, offset = 0x4, fixed_abs, tag = 'smem constant byte address 0x4 - core index']
  #allocation1 [shape = 'u32[144,128]{1,0:T(1,128)}', space=vmem, size = 0x12000, scoped, tag = 'internal scratch']
  #allocation2 [shape = 'f32[32,256]{1,0:T(8,128)}', space=vmem, size = 0x8000, scoped, tag = 'scratch operand']
  %s0 = inlined_call_operand.vmem [shape: f32[2,1,3,384], index: 0, kind: input, shape index: {}]
  %s1 = inlined_call_operand.vmem [shape: f32[64,32], index: 1, kind: input, shape index: {}]
  %s2 = inlined_call_operand.vmem [shape: f32[64,1], index: 2, kind: input, shape index: {}]
  %s3 = inlined_call_operand.hbm [shape: f32[2,64,196], index: 3, kind: output, shape index: {}]
  %s4 = sld [smem:[#allocation0]]
  $region49: #{tpu_custom_call.1} parent=0
    _
  %s6 = ssub.s32 1, %s4
  %s7 = scalar_select 0, %s6, %s4
  $region1: #{tpu_custom_call.1} parent=0
    #allocation3 [shape = 'u8[131072]{0}', space=vmem, size = 0x20000, scoped, tag = 'output window, operand 0']
    #allocation4 [shape = 's32[2]{0}', space=sflag, size = 0x8, scoped, tag = 'scoped memory for tpu_custom_call.1']
    %8 = vsyncpa [#allocation4], 0
    %s9 = scalar_lea.sflag [#allocation4], 1
    %10 = vsyncpa %s9, 0
    loop: start=0, step=1, limit=4
    $region2: #{tpu_custom_call.1} parent=1 // loop_pre_header
      _
    $region3: #{tpu_custom_call.1} parent=1 // loop_header
      %s12 = sphi 0, %s16
      %p13 = scmp.ge.s32.totalorder %s12, 4
      %s19 = sphi 0, %s31
      %s20 = sphi 0, %s27
      %s21 = sphi 0, %s19
      %s22 = sphi 0, %s20
      %s23 = sphi 0, %s21
      %s24 = sphi 0, %s22
      %s36 = sphi 0, %s38
      %s39 = sphi 0, %s36
      %s40 = sphi 0, %s39
      %s56 = sphi 0, %s40
      %s60 = sphi 0, %s60
      %s62 = sphi 0, %s60
      %s63 = sphi 0, %s62
      %s77 = sphi 0, %s63
      %s81 = sphi 0, %s81
      %s83 = sphi 0, %s81
      %s84 = sphi 0, %s83
      %s98 = sphi 0, %s84
      %s104 = sphi 0, %s106
      %s107 = sphi 0, %s104
      %s108 = sphi 0, %s107
      %s124 = sphi 0, %s108
    $region4: #{tpu_custom_call.1} parent=1 // loop_header_branch
      %15 = sbr.rel (%p13) target = $region8
    $region5: #{tpu_custom_call.1} parent=1 // loop_body
      %s17 = ssub.s32 %s12, 1
      %s18 = ssub.s32 %s12, 2
      %s25 = sadd.s32 1, %s20
      %p26 = scmp.ge.s32.totalorder %s25, 1
      %s27 = scalar_select %p26, 0, %s25
      %s28 = sadd.s32 1, %s19
      %s29 = scalar_select %p26, %s28, %s19
      %p30 = scmp.ge.s32.totalorder %s29, 2
      %s31 = scalar_select %p30, 0, %s29
      %s32 = ssub.s32 %s19, %s31
      %s33 = ssub.s32 %s20, %s27
      %s34 = sor.u32 %s32, %s33
      %p35 = scmp.eq.s32.totalorder %s34, 0
      %s37 = sadd.s32 %s36, 1
      %s38 = scalar_select %p35, %s36, %s37
      %p41 = pneg %p35
      %p42 = scmp.eq.s32.totalorder %s12, 1
      %p43 = por %p41, %p42
      %p44 = scmp.ne.s32.totalorder %s36, %s39
      %p45 = scmp.eq.s32.totalorder %s12, 0
      %p46 = por %p44, %p45
      %p47 = scmp.ne.s32.totalorder %s36, %s39
      %p48 = scmp.eq.s32.totalorder %s17, 1
      %p49 = por %p47, %p48
      %p50 = scmp.ne.s32.totalorder %s39, %s40
      %p51 = scmp.eq.s32.totalorder %s17, 0
      %p52 = por %p50, %p51
      %p53 = scmp.ne.s32.totalorder %s39, %s40
      %p54 = scmp.eq.s32.totalorder %s18, 1
      %p55 = por %p53, %p54
      %p57 = scmp.ne.s32.totalorder %s40, %s56
      %p58 = scmp.eq.s32.totalorder %s18, 0
      %p59 = por %p57, %p58
      %s61 = sadd.s32 %s60, 1
      %p64 = scmp.eq.s32.totalorder %s12, 1
      %p65 = scmp.ne.s32.totalorder %s60, %s62
      %p66 = scmp.eq.s32.totalorder %s12, 0
      %p67 = por %p65, %p66
      %p68 = scmp.ne.s32.totalorder %s60, %s62
      %p69 = scmp.eq.s32.totalorder %s17, 1
      %p70 = por %p68, %p69
      %p71 = scmp.ne.s32.totalorder %s62, %s63
      %p72 = scmp.eq.s32.totalorder %s17, 0
      %p73 = por %p71, %p72
      %p74 = scmp.ne.s32.totalorder %s62, %s63
      %p75 = scmp.eq.s32.totalorder %s18, 1
      %p76 = por %p74, %p75
      %p78 = scmp.ne.s32.totalorder %s63, %s77
      %p79 = scmp.eq.s32.totalorder %s18, 0
      %p80 = por %p78, %p79
      %s82 = sadd.s32 %s81, 1
      %p85 = scmp.eq.s32.totalorder %s12, 1
      %p86 = scmp.ne.s32.totalorder %s81, %s83
      %p87 = scmp.eq.s32.totalorder %s12, 0
      %p88 = por %p86, %p87
      %p89 = scmp.ne.s32.totalorder %s81, %s83
      %p90 = scmp.eq.s32.totalorder %s17, 1
      %p91 = por %p89, %p90
      %p92 = scmp.ne.s32.totalorder %s83, %s84
      %p93 = scmp.eq.s32.totalorder %s17, 0
      %p94 = por %p92, %p93
      %p95 = scmp.ne.s32.totalorder %s83, %s84
      %p96 = scmp.eq.s32.totalorder %s18, 1
      %p97 = por %p95, %p96
      %p99 = scmp.ne.s32.totalorder %s84, %s98
      %p100 = scmp.eq.s32.totalorder %s18, 0
      %p101 = por %p99, %p100
      %s102 = ssub.s32 %s19, %s31
      %p103 = scmp.eq.s32.totalorder %s102, 0
      %s105 = sadd.s32 %s104, 1
      %s106 = scalar_select %p103, %s104, %s105
      %p109 = pneg %p103
      %p110 = scmp.eq.s32.totalorder %s12, 1
      %p111 = por %p109, %p110
      %p112 = scmp.ne.s32.totalorder %s104, %s107
      %p113 = scmp.eq.s32.totalorder %s12, 0
      %p114 = por %p112, %p113
      %p115 = scmp.ne.s32.totalorder %s104, %s107
      %p116 = scmp.eq.s32.totalorder %s17, 1
      %p117 = por %p115, %p116
      %p118 = scmp.ne.s32.totalorder %s107, %s108
      %p119 = scmp.eq.s32.totalorder %s17, 0
      %p120 = por %p118, %p119
      %p121 = scmp.ne.s32.totalorder %s107, %s108
      %p122 = scmp.eq.s32.totalorder %s18, 1
      %p123 = por %p121, %p122
      %p125 = scmp.ne.s32.totalorder %s108, %s124
      %p126 = scmp.eq.s32.totalorder %s18, 0
      %p127 = por %p125, %p126
      %p128 = scmp.le.s32.totalorder 1, %s12
      %p129 = scmp.lt.s32.totalorder %s12, 3
      %p130 = pnand %p128, %p129
      %p131 = pneg %p130
      // Predicated region
      $region9: #{tpu_custom_call.1} parent=5 // pred_check
        _
      $region10: #{tpu_custom_call.1} parent=5 // pred_check_branch
        %133 = sbr.rel (%p130) target = $region12
      $region11: #{tpu_custom_call.1} parent=5 // pred_region
        %s134 = ssub.s32 %s12, 1
        // Predicated region
        $region13: #{tpu_custom_call.1} parent=11 // pred_check
          %p135 = pneg %p73
        $region14: #{tpu_custom_call.1} parent=11 // pred_check_branch
          %137 = sbr.rel (%p135) target = $region16
        $region15: #{tpu_custom_call.1} parent=11 // pred_region
          _
        $region16: #{tpu_custom_call.1} parent=11 // pred_fallthru
          _
        // Predicated region
        $region17: #{tpu_custom_call.1} parent=11 // pred_check
          %p138 = pneg %p94
        $region18: #{tpu_custom_call.1} parent=11 // pred_check_branch
          %140 = sbr.rel (%p138) target = $region20
        $region19: #{tpu_custom_call.1} parent=11 // pred_region
          _
        $region20: #{tpu_custom_call.1} parent=11 // pred_fallthru
          _
      $region12: #{tpu_custom_call.1} parent=5 // pred_fallthru
        _
      %p141 = scmp.lt.s32.totalorder %s12, 2
      // Predicated region
      $region21: #{tpu_custom_call.1} parent=5 // pred_check
        %p142 = pneg %p141
      $region22: #{tpu_custom_call.1} parent=5 // pred_check_branch
        %144 = sbr.rel (%p142) target = $region24
      $region23: #{tpu_custom_call.1} parent=5 // pred_region
        // Predicated region
        $region25: #{tpu_custom_call.1} parent=23 // pred_check
          %p145 = pneg %p46
        $region26: #{tpu_custom_call.1} parent=23 // pred_check_branch
          %147 = sbr.rel (%p145) target = $region28
        $region27: #{tpu_custom_call.1} parent=23 // pred_region
          %p148 = scmp.lt.s32.totalorder %s19, 1
          %s149 = scalar_select %p148, %s19, 1
          %p150 = scmp.lt.s32.totalorder %s20, 0
          %s151 = scalar_select %p150, %s20, 0
          %s152 = smul.addr %s151, 3
          %s153 = smul.addr %s149, 3
          %s154 = sadd.s32 %s152, %s153
          %s155 = smul.addr %s154, 4
          %s156 = scalar_lea.vmem %s0, %s155
        $region28: #{tpu_custom_call.1} parent=23 // pred_fallthru
          _
      $region24: #{tpu_custom_call.1} parent=5 // pred_fallthru
        _
      %p157 = scmp.le.s32.totalorder 1, %s12
      %p158 = scmp.lt.s32.totalorder %s12, 3
      %p159 = pnand %p157, %p158
      %p160 = pneg %p159
      // Predicated region
      $region29: #{tpu_custom_call.1} parent=5 // pred_check
        _
      $region30: #{tpu_custom_call.1} parent=5 // pred_check_branch
        %162 = sbr.rel (%p159) target = $region32
      $region31: #{tpu_custom_call.1} parent=5 // pred_region
        %s163 = ssub.s32 %s12, 1
        %p164 = scmp.lt.s32.totalorder %s21, 1
        %s165 = scalar_select %p164, %s21, 1
        %p166 = scmp.lt.s32.totalorder %s22, 0
        %s167 = scalar_select %p166, %s22, 0
        %s168 = smul.addr %s167, 3
        %s169 = smul.addr %s165, 3
        %s170 = sadd.s32 %s168, %s169
        %s171 = smul.addr %s170, 4
        %s172 = scalar_lea.vmem %s0, %s171
        %p173 = pneg %p52
        %p174 = pneg %p49
        %p175 = pneg %p73
        %p176 = pneg %p70
        %p177 = pneg %p94
        %p178 = pneg %p91
        %p179 = pneg %p120
        %p180 = pneg %p117
        %s181 = sand.u32 %s107, 1
        %s182 = scalar_lea.sflag [#allocation4], %s181
        %s183 = sand.u32 %s107, 1
        %s184 = smul.addr %s183, 128
        %s185 = scalar_lea.vmem [#allocation3], %s184
        %p186 = scmp.lt.s32.totalorder %s21, 1
        %s187 = scalar_select %p186, %s21, 1
        %p188 = scmp.lt.s32.totalorder %s22, 0
        %s189 = scalar_select %p188, %s22, 0
        %s190 = smul.addr %s189, 3
        %s191 = smul.addr %s187, 3
        %s192 = sadd.s32 %s190, %s191
        %s193 = smul.addr %s192, 4
        %s194 = scalar_lea.vmem %s0, %s193
        %p195 = scmp.eq.s32.totalorder %s22, 0
        // Predicated region
        $region33: #{tpu_custom_call.1} parent=31 // pred_check
          %p196 = pneg %p195
        $region34: #{tpu_custom_call.1} parent=31 // pred_check_branch
          %198 = sbr.rel (%p196) target = $region36
        $region35: #{tpu_custom_call.1} parent=31 // pred_region
          %199 = vst [vmem:[#allocation2 + $0x30] sm:$0xf8] 0.0
          %200 = vst [vmem:[#allocation2 + $0x38] sm:$0xf8] 0.0
        $region36: #{tpu_custom_call.1} parent=31 // pred_fallthru
          _
        %v201 = vld [vmem:[%s194] sm:$0x77]
        %v203 = vcombine.high %v201, %v201
        %205 = vst [vmem:[#allocation2] sm:$0x7] %v201
        %206 = vst [vmem:[#allocation2 + $0x8] sm:$0x7] %v203
        %v207 = vld [vmem:[%s194] sm:$0x77]
        %v208 = vld [vmem:[%s194 + $0x8] sm:$0x7]
        %v211 = vcombine.high %v207, %v207
        %v212 = vrot.slane %v207, 5
        %v213 = vrot.slane %v211, 5
        %v214 = vrot.slane %v208, 5
        %215 = vrot.lane.b32.xlu0 %v212, 127
        %v216 = vpop.permute.xlu0 %215
        %217 = vrot.lane.b32.xlu0 %v213, 127
        %v218 = vpop.permute.xlu0 %217
        %219 = vrot.lane.b32.xlu0 %v214, 127
        %v220 = vpop.permute.xlu0 %219
        %vm221 = vcmask 1039360
        %v222 = vsel %vm221, %v216, %v218
        %v223 = vsel %vm221, %v218, %v220
        %226 = vst [vmem:[#allocation2] sm:$0x38] %v222
        %227 = vst [vmem:[#allocation2 + $0x8] sm:$0x38] %v223
        %v228 = vld [vmem:[%s194] sm:$0x77]
        %v229 = vld [vmem:[%s194 + $0x8] sm:$0x7]
        %v232 = vcombine.high %v228, %v228
        %v233 = vrot.slane %v228, 2
        %v234 = vrot.slane %v232, 2
        %v235 = vrot.slane %v229, 2
        %236 = vrot.lane.b32.xlu0 %v233, 126
        %v237 = vpop.permute.xlu0 %236
        %238 = vrot.lane.b32.xlu0 %v234, 126
        %v239 = vpop.permute.xlu0 %238
        %240 = vrot.lane.b32.xlu0 %v235, 126
        %v241 = vpop.permute.xlu0 %240
        %vm242 = vcmask 1031168
        %v243 = vsel %vm242, %v237, %v239
        %v244 = vsel %vm242, %v239, %v241
        %247 = vst [vmem:[#allocation2] sm:$0xc0] %v243
        %248 = vst [vmem:[#allocation2 + $0x8] sm:$0xc0] %v244
        %249 = vst [vmem:[#allocation2 + $0x10] sm:$0x1] %v243
        %250 = vst [vmem:[#allocation2 + $0x18] sm:$0x1] %v244
        %v251 = vld [vmem:[%s194] sm:$0x77]
        %v252 = vld [vmem:[%s194 + $0x8] sm:$0x7]
        %v255 = vcombine.high %v251, %v251
        %v256 = vrot.slane %v251, 7
        %v257 = vrot.slane %v255, 7
        %v258 = vrot.slane %v252, 7
        %259 = vrot.lane.b32.xlu0 %v256, 112
        %v260 = vpop.permute.xlu0 %259
        %261 = vrot.lane.b32.xlu0 %v257, 112
        %v262 = vpop.permute.xlu0 %261
        %263 = vrot.lane.b32.xlu0 %v258, 112
        %v264 = vpop.permute.xlu0 %263
        %vm265 = vcmask 916480
        %v266 = vsel %vm265, %v260, %v262
        %v267 = vsel %vm265, %v262, %v264
        %270 = vst [vmem:[#allocation2 + $0x10] sm:$0xe] %v266
        %271 = vst [vmem:[#allocation2 + $0x18] sm:$0xe] %v267
        %v272 = vld [vmem:[%s194] sm:$0x77]
        %v273 = vld [vmem:[%s194 + $0x8] sm:$0x7]
        %v276 = vcombine.low %v272, %v272
        %v277 = vcombine.low %v273, %v273
        %278 = vrot.lane.b32.xlu0 %v276, 111
        %v279 = vpop.permute.xlu0 %278
        %280 = vrot.lane.b32.xlu0 %v272, 111
        %v281 = vpop.permute.xlu0 %280
        %282 = vrot.lane.b32.xlu0 %v277, 111
        %v283 = vpop.permute.xlu0 %282
        %vm284 = vcmask 908288
        %v285 = vsel %vm284, %v279, %v281
        %v286 = vsel %vm284, %v281, %v283
        %289 = vst [vmem:[#allocation2 + $0x10] sm:$0x70] %v285
        %290 = vst [vmem:[#allocation2 + $0x18] sm:$0x70] %v286
        %v291 = vld [vmem:[%s194] sm:$0x77]
        %v292 = vld [vmem:[%s194 + $0x8] sm:$0x7]
        %v295 = vcombine.high %v291, %v291
        %v296 = vrot.slane %v291, 1
        %v297 = vrot.slane %v295, 1
        %v298 = vrot.slane %v292, 1
        %299 = vrot.lane.b32.xlu0 %v296, 110
        %v300 = vpop.permute.xlu0 %299
        %301 = vrot.lane.b32.xlu0 %v297, 110
        %v302 = vpop.permute.xlu0 %301
        %303 = vrot.lane.b32.xlu0 %v298, 110
        %v304 = vpop.permute.xlu0 %303
        %vm305 = vcmask 900096
        %v306 = vsel %vm305, %v300, %v302
        %v307 = vsel %vm305, %v302, %v304
        %310 = vst [vmem:[#allocation2 + $0x10] sm:$0x80] %v306
        %311 = vst [vmem:[#allocation2 + $0x18] sm:$0x80] %v307
        %312 = vst [vmem:[#allocation2 + $0x20] sm:$0x3] %v306
        %313 = vst [vmem:[#allocation2 + $0x28] sm:$0x3] %v307
        %v314 = vld [vmem:[%s194] sm:$0x77]
        %v315 = vld [vmem:[%s194 + $0x8] sm:$0x7]
        %v318 = vcombine.high %v314, %v314
        %v319 = vrot.slane %v314, 6
        %v320 = vrot.slane %v318, 6
        %v321 = vrot.slane %v315, 6
        %322 = vrot.lane.b32.xlu0 %v319, 96
        %v323 = vpop.permute.xlu0 %322
        %324 = vrot.lane.b32.xlu0 %v320, 96
        %v325 = vpop.permute.xlu0 %324
        %326 = vrot.lane.b32.xlu0 %v321, 96
        %v327 = vpop.permute.xlu0 %326
        %vm328 = vcmask 785408
        %v329 = vsel %vm328, %v323, %v325
        %v330 = vsel %vm328, %v325, %v327
        %333 = vst [vmem:[#allocation2 + $0x20] sm:$0x1c] %v329
        %334 = vst [vmem:[#allocation2 + $0x28] sm:$0x1c] %v330
        %v335 = vld [vmem:[%s194] sm:$0x77]
        %v336 = vld [vmem:[%s194 + $0x8] sm:$0x7]
        %v339 = vcombine.high %v335, %v335
        %v340 = vrot.slane %v335, 3
        %v341 = vrot.slane %v339, 3
        %v342 = vrot.slane %v336, 3
        %343 = vrot.lane.b32.xlu0 %v340, 95
        %v344 = vpop.permute.xlu0 %343
        %345 = vrot.lane.b32.xlu0 %v341, 95
        %v346 = vpop.permute.xlu0 %345
        %347 = vrot.lane.b32.xlu0 %v342, 95
        %v348 = vpop.permute.xlu0 %347
        %vm349 = vcmask 777216
        %v350 = vsel %vm349, %v344, %v346
        %v351 = vsel %vm349, %v346, %v348
        %354 = vst [vmem:[#allocation2 + $0x20] sm:$0xe0] %v350
        %355 = vst [vmem:[#allocation2 + $0x28] sm:$0xe0] %v351
        %v356 = vld [vmem:[%s194] sm:$0x77]
        %v357 = vld [vmem:[%s194 + $0x8] sm:$0x7]
        %v360 = vcombine.high %v356, %v356
        %361 = vrot.lane.b32.xlu0 %v356, 94
        %v362 = vpop.permute.xlu0 %361
        %363 = vrot.lane.b32.xlu0 %v360, 94
        %v364 = vpop.permute.xlu0 %363
        %365 = vrot.lane.b32.xlu0 %v357, 94
        %v366 = vpop.permute.xlu0 %365
        %vm367 = vcmask 769024
        %v368 = vsel %vm367, %v362, %v364
        %v369 = vsel %vm367, %v364, %v366
        %372 = vst [vmem:[#allocation2 + $0x30] sm:$0x7] %v368
        %373 = vst [vmem:[#allocation2 + $0x38] sm:$0x7] %v369
        %v374 = vld [vmem:[%s1] sm:$0xff]
        %v375 = vld [vmem:[%s1 + $0x8] sm:$0xff]
        %v376 = vld [vmem:[%s1 + $0x10] sm:$0xff]
        %v377 = vld [vmem:[%s1 + $0x18] sm:$0xff]
        %v378 = vld [vmem:[%s1 + $0x20] sm:$0xff]
        %v379 = vld [vmem:[%s1 + $0x28] sm:$0xff]
        %v380 = vld [vmem:[%s1 + $0x30] sm:$0xff]
        %v381 = vld [vmem:[%s1 + $0x38] sm:$0xff]
        %v382 = vld [vmem:[#allocation2] sm:$0xff]
        %v383 = vld [vmem:[#allocation2 + $0x8] sm:$0xff]
        %v384 = vld [vmem:[#allocation2 + $0x10] sm:$0xff]
        %v385 = vld [vmem:[#allocation2 + $0x18] sm:$0xff]
        %v386 = vld [vmem:[#allocation2 + $0x20] sm:$0xff]
        %v387 = vld [vmem:[#allocation2 + $0x28] sm:$0xff]
        %v388 = vld [vmem:[#allocation2 + $0x30] sm:$0xff]
        %v389 = vld [vmem:[#allocation2 + $0x38] sm:$0xff]
        %v390 = vld [vmem:[%s2] sm:$0xff]
        %v391 = vld [vmem:[%s2 + $0x8] sm:$0xff]
        %v392 = vld [vmem:[%s2 + $0x10] sm:$0xff]
        %v393 = vld [vmem:[%s2 + $0x18] sm:$0xff]
        %v394 = vld [vmem:[%s2 + $0x20] sm:$0xff]
        %v395 = vld [vmem:[%s2 + $0x28] sm:$0xff]
        %v396 = vld [vmem:[%s2 + $0x30] sm:$0xff]
        %v397 = vld [vmem:[%s2 + $0x38] sm:$0xff]
        %399 = vset.pattern.permute.xlu0 0
        %400 = vperm.xlu0 %399, %v390
        %v401 = vpop.permute.xlu0 %400
        %404 = vset.pattern.permute.xlu0 0
        %405 = vperm.xlu0 %404, %v391
        %v406 = vpop.permute.xlu0 %405
        %409 = vset.pattern.permute.xlu0 0
        %410 = vperm.xlu0 %409, %v392
        %v411 = vpop.permute.xlu0 %410
        %414 = vset.pattern.permute.xlu0 0
        %415 = vperm.xlu0 %414, %v393
        %v416 = vpop.permute.xlu0 %415
        %419 = vset.pattern.permute.xlu0 0
        %420 = vperm.xlu0 %419, %v394
        %v421 = vpop.permute.xlu0 %420
        %424 = vset.pattern.permute.xlu0 0
        %425 = vperm.xlu0 %424, %v395
        %v426 = vpop.permute.xlu0 %425
        %429 = vset.pattern.permute.xlu0 0
        %430 = vperm.xlu0 %429, %v396
        %v431 = vpop.permute.xlu0 %430
        %434 = vset.pattern.permute.xlu0 0
        %435 = vperm.xlu0 %434, %v397
        %v436 = vpop.permute.xlu0 %435
        %vm438 = vcmask 261120
        %v440 = vsel %vm438, %v374, 0
        %v443 = vsel %vm438, %v375, 0
        %v446 = vsel %vm438, %v376, 0
        %v449 = vsel %vm438, %v377, 0
        %v452 = vsel %vm438, %v378, 0
        %v455 = vsel %vm438, %v379, 0
        %v458 = vsel %vm438, %v380, 0
        %v461 = vsel %vm438, %v381, 0
        %463 = vmatprep.subr.mxu0 %v383
        %464 = vmatpush1.msra.mxu0 %v382
        %465 = vmatprep.subr.mxu0 %v385
        %466 = vmatpush1.msra.mxu0 %v384
        %467 = vmatprep.subr.mxu0 %v387
        %468 = vmatpush1.msra.mxu0 %v386
        %469 = vmatprep.subr.mxu0 %v389
        %470 = vmatpush1.msra.mxu0 %v388
        %471 = vmatprep.subr.mxu0 0.0
        %472 = vmatpush1.msra.mxu0 0.0
        %473 = vmatprep.subr.mxu0 0.0
        %474 = vmatpush1.msra.mxu0 0.0
        %475 = vmatprep.subr.mxu0 0.0
        %476 = vmatpush1.msra.mxu0 0.0
        %477 = vmatprep.subr.mxu0 0.0
        %478 = vmatpush1.msra.mxu0 0.0
        %479 = vmatprep.subr.mxu0 0.0
        %480 = vmatpush1.msra.mxu0 0.0
        %481 = vmatprep.subr.mxu0 0.0
        %482 = vmatpush1.msra.mxu0 0.0
        %483 = vmatprep.subr.mxu0 0.0
        %484 = vmatpush1.msra.mxu0 0.0
        %485 = vmatprep.subr.mxu0 0.0
        %486 = vmatpush1.msra.mxu0 0.0
        %487 = vmatprep.subr.mxu0 0.0
        %488 = vmatpush1.msra.mxu0 0.0
        %489 = vmatprep.subr.mxu0 0.0
        %490 = vmatpush1.msra.mxu0 0.0
        %491 = vmatprep.subr.mxu0 0.0
        %492 = vmatpush1.msra.mxu0 0.0
        %493 = vmatprep.subr.mxu0 0.0
        %494 = vmatpush1.msra.mxu0 0.0
        %495 = vmatprep.subr.mxu0 0.0
        %496 = vmatpush1.msra.mxu0 0.0
        %497 = vmatprep.subr.mxu0 0.0
        %498 = vmatpush1.msra.mxu0 0.0
        %499 = vmatprep.subr.mxu0 0.0
        %500 = vmatpush1.msra.mxu0 0.0
        %501 = vmatprep.subr.mxu0 0.0
        %502 = vmatpush1.msra.mxu0 0.0
        %503 = vmatprep.subr.mxu0 0.0
        %504 = vmatpush1.msra.mxu0 0.0
        %505 = vmatprep.subr.mxu0 0.0
        %506 = vmatpush1.msra.mxu0 0.0
        %507 = vmatprep.subr.mxu0 0.0
        %508 = vmatpush1.msra.mxu0 0.0
        %509 = vmatprep.subr.mxu0 0.0
        %510 = vmatpush1.msra.mxu0 0.0
        %511 = vmatprep.subr.mxu0 0.0
        %512 = vmatpush1.msra.mxu0 0.0
        %513 = vmatprep.subr.mxu0 0.0
        %514 = vmatpush1.msra.mxu0 0.0
        %515 = vmatprep.subr.mxu0 0.0
        %516 = vmatpush1.msra.mxu0 0.0
        %517 = vmatprep.subr.mxu0 0.0
        %518 = vmatpush1.msra.mxu0 0.0
        %519 = vmatprep.subr.mxu0 0.0
        %520 = vmatpush1.msra.mxu0 0.0
        %521 = vmatprep.subr.mxu0 0.0
        %522 = vmatpush1.msra.mxu0 0.0
        %523 = vmatprep.subr.mxu0 0.0
        %524 = vmatpush1.msra.mxu0 0.0
        %525 = vmatprep.subr.mxu0 0.0
        %526 = vmatpush1.msra.mxu0 0.0
        %527 = vmatprep.mubr.f32.mxu0 0.0
        %528 = vmatmul.mubr.f32.gmra.mrb[0].mxu0 %v440
        %v529 = vpop.f32.mrb[0].mxu0
        %v530 = vadd.f32 %v401, %v529
        %v531 = vpop.f32.mrb[0].mxu0
        %v532 = vadd.f32 %v401, %v531
        %533 = vmatprep.mubr.f32.mxu0 0.0
        %534 = vmatmul.mubr.f32.gmra.mrb[0].mxu0 %v443
        %v535 = vpop.f32.mrb[0].mxu0
        %v536 = vadd.f32 %v406, %v535
        %v537 = vpop.f32.mrb[0].mxu0
        %v538 = vadd.f32 %v406, %v537
        %539 = vmatprep.mubr.f32.mxu0 0.0
        %540 = vmatmul.mubr.f32.gmra.mrb[0].mxu0 %v446
        %v541 = vpop.f32.mrb[0].mxu0
        %v542 = vadd.f32 %v411, %v541
        %v543 = vpop.f32.mrb[0].mxu0
        %v544 = vadd.f32 %v411, %v543
        %545 = vmatprep.mubr.f32.mxu0 0.0
        %546 = vmatmul.mubr.f32.gmra.mrb[0].mxu0 %v449
        %v547 = vpop.f32.mrb[0].mxu0
        %v548 = vadd.f32 %v416, %v547
        %v549 = vpop.f32.mrb[0].mxu0
        %v550 = vadd.f32 %v416, %v549
        %551 = vmatprep.mubr.f32.mxu0 0.0
        %552 = vmatmul.mubr.f32.gmra.mrb[0].mxu0 %v452
        %v553 = vpop.f32.mrb[0].mxu0
        %v554 = vadd.f32 %v421, %v553
        %v555 = vpop.f32.mrb[0].mxu0
        %v556 = vadd.f32 %v421, %v555
        %557 = vmatprep.mubr.f32.mxu0 0.0
        %558 = vmatmul.mubr.f32.gmra.mrb[0].mxu0 %v455
        %v559 = vpop.f32.mrb[0].mxu0
        %v560 = vadd.f32 %v426, %v559
        %v561 = vpop.f32.mrb[0].mxu0
        %v562 = vadd.f32 %v426, %v561
        %563 = vmatprep.mubr.f32.mxu0 0.0
        %564 = vmatmul.mubr.f32.gmra.mrb[0].mxu0 %v458
        %v565 = vpop.f32.mrb[0].mxu0
        %v566 = vadd.f32 %v431, %v565
        %v567 = vpop.f32.mrb[0].mxu0
        %v568 = vadd.f32 %v431, %v567
        %569 = vmatprep.mubr.f32.mxu0 0.0
        %570 = vmatmul.mubr.f32.gmra.mrb[0].mxu0 %v461
        %v571 = vpop.f32.mrb[0].mxu0
        %v572 = vadd.f32 %v436, %v571
        %v573 = vpop.f32.mrb[0].mxu0
        %v574 = vadd.f32 %v436, %v573
        %575 = vdwg.mxu0
        %vm576 = vcmask 113664
        %577 = vst.msk [vmem:[%s185] sm:$0xff] %vm576, %v530
        %578 = vst.msk [vmem:[%s185 + $0x10] sm:$0xff] %vm576, %v536
        %579 = vst.msk [vmem:[%s185 + $0x20] sm:$0xff] %vm576, %v542
        %580 = vst.msk [vmem:[%s185 + $0x30] sm:$0xff] %vm576, %v548
        %581 = vst.msk [vmem:[%s185 + $0x40] sm:$0xff] %vm576, %v554
        %582 = vst.msk [vmem:[%s185 + $0x50] sm:$0xff] %vm576, %v560
        %583 = vst.msk [vmem:[%s185 + $0x60] sm:$0xff] %vm576, %v566
        %584 = vst.msk [vmem:[%s185 + $0x70] sm:$0xff] %vm576, %v572
        %593 = vrot.lane.b32.xlu0 %v530, 126
        %v594 = vpop.permute.xlu0 %593
        %595 = vrot.lane.b32.xlu0 %v536, 126
        %v596 = vpop.permute.xlu0 %595
        %597 = vrot.lane.b32.xlu0 %v542, 126
        %v598 = vpop.permute.xlu0 %597
        %599 = vrot.lane.b32.xlu0 %v548, 126
        %v600 = vpop.permute.xlu0 %599
        %601 = vrot.lane.b32.xlu0 %v554, 126
        %v602 = vpop.permute.xlu0 %601
        %603 = vrot.lane.b32.xlu0 %v560, 126
        %v604 = vpop.permute.xlu0 %603
        %605 = vrot.lane.b32.xlu0 %v566, 126
        %v606 = vpop.permute.xlu0 %605
        %607 = vrot.lane.b32.xlu0 %v572, 126
        %v608 = vpop.permute.xlu0 %607
        %vm617 = vcmask 228464
        %618 = vst.msk [vmem:[%s185] sm:$0xff] %vm617, %v594
        %619 = vst.msk [vmem:[%s185 + $0x10] sm:$0xff] %vm617, %v596
        %620 = vst.msk [vmem:[%s185 + $0x20] sm:$0xff] %vm617, %v598
        %621 = vst.msk [vmem:[%s185 + $0x30] sm:$0xff] %vm617, %v600
        %622 = vst.msk [vmem:[%s185 + $0x40] sm:$0xff] %vm617, %v602
        %623 = vst.msk [vmem:[%s185 + $0x50] sm:$0xff] %vm617, %v604
        %624 = vst.msk [vmem:[%s185 + $0x60] sm:$0xff] %vm617, %v606
        %625 = vst.msk [vmem:[%s185 + $0x70] sm:$0xff] %vm617, %v608
        %626 = vrot.lane.b32.xlu0 %v530, 124
        %v627 = vpop.permute.xlu0 %626
        %628 = vrot.lane.b32.xlu0 %v536, 124
        %v629 = vpop.permute.xlu0 %628
        %630 = vrot.lane.b32.xlu0 %v542, 124
        %v631 = vpop.permute.xlu0 %630
        %632 = vrot.lane.b32.xlu0 %v548, 124
        %v633 = vpop.permute.xlu0 %632
        %634 = vrot.lane.b32.xlu0 %v554, 124
        %v635 = vpop.permute.xlu0 %634
        %636 = vrot.lane.b32.xlu0 %v560, 124
        %v637 = vpop.permute.xlu0 %636
        %638 = vrot.lane.b32.xlu0 %v566, 124
        %v639 = vpop.permute.xlu0 %638
        %640 = vrot.lane.b32.xlu0 %v572, 124
        %v641 = vpop.permute.xlu0 %640
        %vm650 = vcmask 343264
        %651 = vst.msk [vmem:[%s185] sm:$0xff] %vm650, %v627
        %652 = vst.msk [vmem:[%s185 + $0x10] sm:$0xff] %vm650, %v629
        %653 = vst.msk [vmem:[%s185 + $0x20] sm:$0xff] %vm650, %v631
        %654 = vst.msk [vmem:[%s185 + $0x30] sm:$0xff] %vm650, %v633
        %655 = vst.msk [vmem:[%s185 + $0x40] sm:$0xff] %vm650, %v635
        %656 = vst.msk [vmem:[%s185 + $0x50] sm:$0xff] %vm650, %v637
        %657 = vst.msk [vmem:[%s185 + $0x60] sm:$0xff] %vm650, %v639
        %658 = vst.msk [vmem:[%s185 + $0x70] sm:$0xff] %vm650, %v641
        %659 = vrot.lane.b32.xlu0 %v530, 122
        %v660 = vpop.permute.xlu0 %659
        %661 = vrot.lane.b32.xlu0 %v536, 122
        %v662 = vpop.permute.xlu0 %661
        %663 = vrot.lane.b32.xlu0 %v542, 122
        %v664 = vpop.permute.xlu0 %663
        %665 = vrot.lane.b32.xlu0 %v548, 122
        %v666 = vpop.permute.xlu0 %665
        %667 = vrot.lane.b32.xlu0 %v554, 122
        %v668 = vpop.permute.xlu0 %667
        %669 = vrot.lane.b32.xlu0 %v560, 122
        %v670 = vpop.permute.xlu0 %669
        %671 = vrot.lane.b32.xlu0 %v566, 122
        %v672 = vpop.permute.xlu0 %671
        %673 = vrot.lane.b32.xlu0 %v572, 122
        %v674 = vpop.permute.xlu0 %673
        %vm683 = vcmask 458064
        %684 = vst.msk [vmem:[%s185] sm:$0xff] %vm683, %v660
        %685 = vst.msk [vmem:[%s185 + $0x10] sm:$0xff] %vm683, %v662
        %686 = vst.msk [vmem:[%s185 + $0x20] sm:$0xff] %vm683, %v664
        %687 = vst.msk [vmem:[%s185 + $0x30] sm:$0xff] %vm683, %v666
        %688 = vst.msk [vmem:[%s185 + $0x40] sm:$0xff] %vm683, %v668
        %689 = vst.msk [vmem:[%s185 + $0x50] sm:$0xff] %vm683, %v670
        %690 = vst.msk [vmem:[%s185 + $0x60] sm:$0xff] %vm683, %v672
        %691 = vst.msk [vmem:[%s185 + $0x70] sm:$0xff] %vm683, %v674
        %692 = vrot.lane.b32.xlu0 %v530, 120
        %v693 = vpop.permute.xlu0 %692
        %694 = vrot.lane.b32.xlu0 %v536, 120
        %v695 = vpop.permute.xlu0 %694
        %696 = vrot.lane.b32.xlu0 %v542, 120
        %v697 = vpop.permute.xlu0 %696
        %698 = vrot.lane.b32.xlu0 %v548, 120
        %v699 = vpop.permute.xlu0 %698
        %700 = vrot.lane.b32.xlu0 %v554, 120
        %v701 = vpop.permute.xlu0 %700
        %702 = vrot.lane.b32.xlu0 %v560, 120
        %v703 = vpop.permute.xlu0 %702
        %704 = vrot.lane.b32.xlu0 %v566, 120
        %v705 = vpop.permute.xlu0 %704
        %706 = vrot.lane.b32.xlu0 %v572, 120
        %v707 = vpop.permute.xlu0 %706
        %vm716 = vcmask 572864
        %717 = vst.msk [vmem:[%s185] sm:$0xff] %vm716, %v693
        %718 = vst.msk [vmem:[%s185 + $0x10] sm:$0xff] %vm716, %v695
        %719 = vst.msk [vmem:[%s185 + $0x20] sm:$0xff] %vm716, %v697
        %720 = vst.msk [vmem:[%s185 + $0x30] sm:$0xff] %vm716, %v699
        %721 = vst.msk [vmem:[%s185 + $0x40] sm:$0xff] %vm716, %v701
        %722 = vst.msk [vmem:[%s185 + $0x50] sm:$0xff] %vm716, %v703
        %723 = vst.msk [vmem:[%s185 + $0x60] sm:$0xff] %vm716, %v705
        %724 = vst.msk [vmem:[%s185 + $0x70] sm:$0xff] %vm716, %v707
        %725 = vrot.lane.b32.xlu0 %v530, 118
        %v726 = vpop.permute.xlu0 %725
        %727 = vrot.lane.b32.xlu0 %v536, 118
        %v728 = vpop.permute.xlu0 %727
        %729 = vrot.lane.b32.xlu0 %v542, 118
        %v730 = vpop.permute.xlu0 %729
        %731 = vrot.lane.b32.xlu0 %v548, 118
        %v732 = vpop.permute.xlu0 %731
        %733 = vrot.lane.b32.xlu0 %v554, 118
        %v734 = vpop.permute.xlu0 %733
        %735 = vrot.lane.b32.xlu0 %v560, 118
        %v736 = vpop.permute.xlu0 %735
        %737 = vrot.lane.b32.xlu0 %v566, 118
        %v738 = vpop.permute.xlu0 %737
        %739 = vrot.lane.b32.xlu0 %v572, 118
        %v740 = vpop.permute.xlu0 %739
        %vm749 = vcmask 687664
        %750 = vst.msk [vmem:[%s185] sm:$0xff] %vm749, %v726
        %751 = vst.msk [vmem:[%s185 + $0x10] sm:$0xff] %vm749, %v728
        %752 = vst.msk [vmem:[%s185 + $0x20] sm:$0xff] %vm749, %v730
        %753 = vst.msk [vmem:[%s185 + $0x30] sm:$0xff] %vm749, %v732
        %754 = vst.msk [vmem:[%s185 + $0x40] sm:$0xff] %vm749, %v734
        %755 = vst.msk [vmem:[%s185 + $0x50] sm:$0xff] %vm749, %v736
        %756 = vst.msk [vmem:[%s185 + $0x60] sm:$0xff] %vm749, %v738
        %757 = vst.msk [vmem:[%s185 + $0x70] sm:$0xff] %vm749, %v740
        %758 = vrot.lane.b32.xlu0 %v530, 116
        %v759 = vpop.permute.xlu0 %758
        %760 = vrot.lane.b32.xlu0 %v536, 116
        %v761 = vpop.permute.xlu0 %760
        %762 = vrot.lane.b32.xlu0 %v542, 116
        %v763 = vpop.permute.xlu0 %762
        %764 = vrot.lane.b32.xlu0 %v548, 116
        %v765 = vpop.permute.xlu0 %764
        %766 = vrot.lane.b32.xlu0 %v554, 116
        %v767 = vpop.permute.xlu0 %766
        %768 = vrot.lane.b32.xlu0 %v560, 116
        %v769 = vpop.permute.xlu0 %768
        %770 = vrot.lane.b32.xlu0 %v566, 116
        %v771 = vpop.permute.xlu0 %770
        %772 = vrot.lane.b32.xlu0 %v572, 116
        %v773 = vpop.permute.xlu0 %772
        %vm782 = vcmask 802464
        %783 = vst.msk [vmem:[%s185] sm:$0xff] %vm782, %v759
        %784 = vst.msk [vmem:[%s185 + $0x10] sm:$0xff] %vm782, %v761
        %785 = vst.msk [vmem:[%s185 + $0x20] sm:$0xff] %vm782, %v763
        %786 = vst.msk [vmem:[%s185 + $0x30] sm:$0xff] %vm782, %v765
        %787 = vst.msk [vmem:[%s185 + $0x40] sm:$0xff] %vm782, %v767
        %788 = vst.msk [vmem:[%s185 + $0x50] sm:$0xff] %vm782, %v769
        %789 = vst.msk [vmem:[%s185 + $0x60] sm:$0xff] %vm782, %v771
        %790 = vst.msk [vmem:[%s185 + $0x70] sm:$0xff] %vm782, %v773
        %791 = vrot.lane.b32.xlu0 %v530, 114
        %v792 = vpop.permute.xlu0 %791
        %793 = vrot.lane.b32.xlu0 %v536, 114
        %v794 = vpop.permute.xlu0 %793
        %795 = vrot.lane.b32.xlu0 %v542, 114
        %v796 = vpop.permute.xlu0 %795
        %797 = vrot.lane.b32.xlu0 %v548, 114
        %v798 = vpop.permute.xlu0 %797
        %799 = vrot.lane.b32.xlu0 %v554, 114
        %v800 = vpop.permute.xlu0 %799
        %801 = vrot.lane.b32.xlu0 %v560, 114
        %v802 = vpop.permute.xlu0 %801
        %803 = vrot.lane.b32.xlu0 %v566, 114
        %v804 = vpop.permute.xlu0 %803
        %805 = vrot.lane.b32.xlu0 %v572, 114
        %v806 = vpop.permute.xlu0 %805
        %vm815 = vcmask 917264
        %816 = vst.msk [vmem:[%s185] sm:$0xff] %vm815, %v792
        %817 = vst.msk [vmem:[%s185 + $0x10] sm:$0xff] %vm815, %v794
        %818 = vst.msk [vmem:[%s185 + $0x20] sm:$0xff] %vm815, %v796
        %819 = vst.msk [vmem:[%s185 + $0x30] sm:$0xff] %vm815, %v798
        %820 = vst.msk [vmem:[%s185 + $0x40] sm:$0xff] %vm815, %v800
        %821 = vst.msk [vmem:[%s185 + $0x50] sm:$0xff] %vm815, %v802
        %822 = vst.msk [vmem:[%s185 + $0x60] sm:$0xff] %vm815, %v804
        %823 = vst.msk [vmem:[%s185 + $0x70] sm:$0xff] %vm815, %v806
        %832 = vrot.lane.b32.xlu0 %v532, 112
        %v833 = vpop.permute.xlu0 %832
        %834 = vrot.lane.b32.xlu0 %v538, 112
        %v835 = vpop.permute.xlu0 %834
        %836 = vrot.lane.b32.xlu0 %v544, 112
        %v837 = vpop.permute.xlu0 %836
        %838 = vrot.lane.b32.xlu0 %v550, 112
        %v839 = vpop.permute.xlu0 %838
        %840 = vrot.lane.b32.xlu0 %v556, 112
        %v841 = vpop.permute.xlu0 %840
        %842 = vrot.lane.b32.xlu0 %v562, 112
        %v843 = vpop.permute.xlu0 %842
        %844 = vrot.lane.b32.xlu0 %v568, 112
        %v845 = vpop.permute.xlu0 %844
        %846 = vrot.lane.b32.xlu0 %v574, 112
        %v847 = vpop.permute.xlu0 %846
        %vm856 = vcmask 1032064
        %857 = vst.msk [vmem:[%s185] sm:$0xff] %vm856, %v833
        %858 = vst.msk [vmem:[%s185 + $0x10] sm:$0xff] %vm856, %v835
        %859 = vst.msk [vmem:[%s185 + $0x20] sm:$0xff] %vm856, %v837
        %860 = vst.msk [vmem:[%s185 + $0x30] sm:$0xff] %vm856, %v839
        %861 = vst.msk [vmem:[%s185 + $0x40] sm:$0xff] %vm856, %v841
        %862 = vst.msk [vmem:[%s185 + $0x50] sm:$0xff] %vm856, %v843
        %863 = vst.msk [vmem:[%s185 + $0x60] sm:$0xff] %vm856, %v845
        %864 = vst.msk [vmem:[%s185 + $0x70] sm:$0xff] %vm856, %v847
        %865 = vrot.lane.b32.xlu0 %v532, 110
        %v866 = vpop.permute.xlu0 %865
        %867 = vrot.lane.b32.xlu0 %v538, 110
        %v868 = vpop.permute.xlu0 %867
        %869 = vrot.lane.b32.xlu0 %v544, 110
        %v870 = vpop.permute.xlu0 %869
        %871 = vrot.lane.b32.xlu0 %v550, 110
        %v872 = vpop.permute.xlu0 %871
        %873 = vrot.lane.b32.xlu0 %v556, 110
        %v874 = vpop.permute.xlu0 %873
        %875 = vrot.lane.b32.xlu0 %v562, 110
        %v876 = vpop.permute.xlu0 %875
        %877 = vrot.lane.b32.xlu0 %v568, 110
        %v878 = vpop.permute.xlu0 %877
        %879 = vrot.lane.b32.xlu0 %v574, 110
        %v880 = vpop.permute.xlu0 %879
        %vm889 = vcmask 1048560
        %890 = vst.msk [vmem:[%s185] sm:$0xff] %vm889, %v866
        %vm891 = vcmask 97280
        %892 = vst.msk [vmem:[%s185 + $0x8] sm:$0xff] %vm891, %v866
        %893 = vst.msk [vmem:[%s185 + $0x10] sm:$0xff] %vm889, %v868
        %894 = vst.msk [vmem:[%s185 + $0x18] sm:$0xff] %vm891, %v868
        %895 = vst.msk [vmem:[%s185 + $0x20] sm:$0xff] %vm889, %v870
        %896 = vst.msk [vmem:[%s185 + $0x28] sm:$0xff] %vm891, %v870
        %897 = vst.msk [vmem:[%s185 + $0x30] sm:$0xff] %vm889, %v872
        %898 = vst.msk [vmem:[%s185 + $0x38] sm:$0xff] %vm891, %v872
        %899 = vst.msk [vmem:[%s185 + $0x40] sm:$0xff] %vm889, %v874
        %900 = vst.msk [vmem:[%s185 + $0x48] sm:$0xff] %vm891, %v874
        %901 = vst.msk [vmem:[%s185 + $0x50] sm:$0xff] %vm889, %v876
        %902 = vst.msk [vmem:[%s185 + $0x58] sm:$0xff] %vm891, %v876
        %903 = vst.msk [vmem:[%s185 + $0x60] sm:$0xff] %vm889, %v878
        %904 = vst.msk [vmem:[%s185 + $0x68] sm:$0xff] %vm891, %v878
        %905 = vst.msk [vmem:[%s185 + $0x70] sm:$0xff] %vm889, %v880
        %906 = vst.msk [vmem:[%s185 + $0x78] sm:$0xff] %vm891, %v880
        %907 = vrot.lane.b32.xlu0 %v532, 108
        %v908 = vpop.permute.xlu0 %907
        %909 = vrot.lane.b32.xlu0 %v538, 108
        %v910 = vpop.permute.xlu0 %909
        %911 = vrot.lane.b32.xlu0 %v544, 108
        %v912 = vpop.permute.xlu0 %911
        %913 = vrot.lane.b32.xlu0 %v550, 108
        %v914 = vpop.permute.xlu0 %913
        %915 = vrot.lane.b32.xlu0 %v556, 108
        %v916 = vpop.permute.xlu0 %915
        %917 = vrot.lane.b32.xlu0 %v562, 108
        %v918 = vpop.permute.xlu0 %917
        %919 = vrot.lane.b32.xlu0 %v568, 108
        %v920 = vpop.permute.xlu0 %919
        %921 = vrot.lane.b32.xlu0 %v574, 108
        %v922 = vpop.permute.xlu0 %921
        %vm931 = vcmask 212064
        %932 = vst.msk [vmem:[%s185 + $0x8] sm:$0xff] %vm931, %v908
        %933 = vst.msk [vmem:[%s185 + $0x18] sm:$0xff] %vm931, %v910
        %934 = vst.msk [vmem:[%s185 + $0x28] sm:$0xff] %vm931, %v912
        %935 = vst.msk [vmem:[%s185 + $0x38] sm:$0xff] %vm931, %v914
        %936 = vst.msk [vmem:[%s185 + $0x48] sm:$0xff] %vm931, %v916
        %937 = vst.msk [vmem:[%s185 + $0x58] sm:$0xff] %vm931, %v918
        %938 = vst.msk [vmem:[%s185 + $0x68] sm:$0xff] %vm931, %v920
        %939 = vst.msk [vmem:[%s185 + $0x78] sm:$0xff] %vm931, %v922
        %940 = vrot.lane.b32.xlu0 %v532, 106
        %v941 = vpop.permute.xlu0 %940
        %942 = vrot.lane.b32.xlu0 %v538, 106
        %v943 = vpop.permute.xlu0 %942
        %944 = vrot.lane.b32.xlu0 %v544, 106
        %v945 = vpop.permute.xlu0 %944
        %946 = vrot.lane.b32.xlu0 %v550, 106
        %v947 = vpop.permute.xlu0 %946
        %948 = vrot.lane.b32.xlu0 %v556, 106
        %v949 = vpop.permute.xlu0 %948
        %950 = vrot.lane.b32.xlu0 %v562, 106
        %v951 = vpop.permute.xlu0 %950
        %952 = vrot.lane.b32.xlu0 %v568, 106
        %v953 = vpop.permute.xlu0 %952
        %954 = vrot.lane.b32.xlu0 %v574, 106
        %v955 = vpop.permute.xlu0 %954
        %vm964 = vcmask 326864
        %965 = vst.msk [vmem:[%s185 + $0x8] sm:$0xff] %vm964, %v941
        %966 = vst.msk [vmem:[%s185 + $0x18] sm:$0xff] %vm964, %v943
        %967 = vst.msk [vmem:[%s185 + $0x28] sm:$0xff] %vm964, %v945
        %968 = vst.msk [vmem:[%s185 + $0x38] sm:$0xff] %vm964, %v947
        %969 = vst.msk [vmem:[%s185 + $0x48] sm:$0xff] %vm964, %v949
        %970 = vst.msk [vmem:[%s185 + $0x58] sm:$0xff] %vm964, %v951
        %971 = vst.msk [vmem:[%s185 + $0x68] sm:$0xff] %vm964, %v953
        %972 = vst.msk [vmem:[%s185 + $0x78] sm:$0xff] %vm964, %v955
        %973 = vrot.lane.b32.xlu0 %v532, 104
        %v974 = vpop.permute.xlu0 %973
        %975 = vrot.lane.b32.xlu0 %v538, 104
        %v976 = vpop.permute.xlu0 %975
        %977 = vrot.lane.b32.xlu0 %v544, 104
        %v978 = vpop.permute.xlu0 %977
        %979 = vrot.lane.b32.xlu0 %v550, 104
        %v980 = vpop.permute.xlu0 %979
        %981 = vrot.lane.b32.xlu0 %v556, 104
        %v982 = vpop.permute.xlu0 %981
        %983 = vrot.lane.b32.xlu0 %v562, 104
        %v984 = vpop.permute.xlu0 %983
        %985 = vrot.lane.b32.xlu0 %v568, 104
        %v986 = vpop.permute.xlu0 %985
        %987 = vrot.lane.b32.xlu0 %v574, 104
        %v988 = vpop.permute.xlu0 %987
        %vm997 = vcmask 441664
        %998 = vst.msk [vmem:[%s185 + $0x8] sm:$0xff] %vm997, %v974
        %999 = vst.msk [vmem:[%s185 + $0x18] sm:$0xff] %vm997, %v976
        %1000 = vst.msk [vmem:[%s185 + $0x28] sm:$0xff] %vm997, %v978
        %1001 = vst.msk [vmem:[%s185 + $0x38] sm:$0xff] %vm997, %v980
        %1002 = vst.msk [vmem:[%s185 + $0x48] sm:$0xff] %vm997, %v982
        %1003 = vst.msk [vmem:[%s185 + $0x58] sm:$0xff] %vm997, %v984
        %1004 = vst.msk [vmem:[%s185 + $0x68] sm:$0xff] %vm997, %v986
        %1005 = vst.msk [vmem:[%s185 + $0x78] sm:$0xff] %vm997, %v988
        %1006 = vrot.lane.b32.xlu0 %v532, 102
        %v1007 = vpop.permute.xlu0 %1006
        %1008 = vrot.lane.b32.xlu0 %v538, 102
        %v1009 = vpop.permute.xlu0 %1008
        %1010 = vrot.lane.b32.xlu0 %v544, 102
        %v1011 = vpop.permute.xlu0 %1010
        %1012 = vrot.lane.b32.xlu0 %v550, 102
        %v1013 = vpop.permute.xlu0 %1012
        %1014 = vrot.lane.b32.xlu0 %v556, 102
        %v1015 = vpop.permute.xlu0 %1014
        %1016 = vrot.lane.b32.xlu0 %v562, 102
        %v1017 = vpop.permute.xlu0 %1016
        %1018 = vrot.lane.b32.xlu0 %v568, 102
        %v1019 = vpop.permute.xlu0 %1018
        %1020 = vrot.lane.b32.xlu0 %v574, 102
        %v1021 = vpop.permute.xlu0 %1020
        %vm1030 = vcmask 556464
        %1031 = vst.msk [vmem:[%s185 + $0x8] sm:$0xff] %vm1030, %v1007
        %1032 = vst.msk [vmem:[%s185 + $0x18] sm:$0xff] %vm1030, %v1009
        %1033 = vst.msk [vmem:[%s185 + $0x28] sm:$0xff] %vm1030, %v1011
        %1034 = vst.msk [vmem:[%s185 + $0x38] sm:$0xff] %vm1030, %v1013
        %1035 = vst.msk [vmem:[%s185 + $0x48] sm:$0xff] %vm1030, %v1015
        %1036 = vst.msk [vmem:[%s185 + $0x58] sm:$0xff] %vm1030, %v1017
        %1037 = vst.msk [vmem:[%s185 + $0x68] sm:$0xff] %vm1030, %v1019
        %1038 = vst.msk [vmem:[%s185 + $0x78] sm:$0xff] %vm1030, %v1021
        %s1039 = sand.u32 %s107, 1
        %s1040 = scalar_lea.sflag [#allocation4], %s1039
        %s1041 = sand.u32 %s107, 1
        %s1042 = smul.addr %s1041, 128
        %s1043 = scalar_lea.vmem [#allocation3], %s1042
        // Predicated region
        $region37: #{tpu_custom_call.1} parent=31 // pred_check
          %p1044 = pneg %p117
        $region38: #{tpu_custom_call.1} parent=31 // pred_check_branch
          %1046 = sbr.rel (%p1044) target = $region40
        $region39: #{tpu_custom_call.1} parent=31 // pred_region
          %s1048 = ssub.s32 2048, 2048
          %1049 = vsyncadd %s1040, %s1048
          %s1050 = smul.addr %s21, 16
          %s1051 = smul.addr %s1050, 128
          %s1052 = scalar_lea.hbm %s3, %s1051
          %s1053 = sshll.u32 %s1043, 4
          %s1054 = int_to_ptr.vmem [resolvable:$true] %s1053
          %1059 = dma.vmem_to_hbm [thread:$0]  %s1054, 2048, %s1052, %s1040, 256, 256, 16
        $region40: #{tpu_custom_call.1} parent=31 // pred_fallthru
          _
      $region32: #{tpu_custom_call.1} parent=5 // pred_fallthru
        _
      %p1060 = scmp.le.s32.totalorder 2, %s12
      // Predicated region
      $region41: #{tpu_custom_call.1} parent=5 // pred_check
        %p1061 = pneg %p1060
      $region42: #{tpu_custom_call.1} parent=5 // pred_check_branch
        %1063 = sbr.rel (%p1061) target = $region44
      $region43: #{tpu_custom_call.1} parent=5 // pred_region
        %s1064 = ssub.s32 %s12, 2
        // Predicated region
        $region45: #{tpu_custom_call.1} parent=43 // pred_check
          %p1065 = pneg %p123
        $region46: #{tpu_custom_call.1} parent=43 // pred_check_branch
          %1067 = sbr.rel (%p1065) target = $region48
        $region47: #{tpu_custom_call.1} parent=43 // pred_region
          %s1068 = sand.u32 %s108, 1
          %s1069 = scalar_lea.sflag [#allocation4], %s1068
          %s1070 = sand.u32 %s108, 1
          %s1071 = smul.addr %s1070, 128
          %s1072 = scalar_lea.vmem [#allocation3], %s1071
          %1073 = dma.done %s1069, 2048
        $region48: #{tpu_custom_call.1} parent=43 // pred_fallthru
          _
      $region44: #{tpu_custom_call.1} parent=5 // pred_fallthru
        _
    $region6: #{tpu_custom_call.1} parent=1 // loop_footer
      %s16 = sadd.s32 1, %s12
    $region7: #{tpu_custom_call.1} parent=1 // loop_footer_branch
      %11 = sbr.rel target = $region3
    $region8: #{tpu_custom_call.1} parent=1 // loop_exit
      _
    %1074 = vsyncpa [#allocation4], 1
    %s1075 = scalar_lea.sflag [#allocation4], 1
    %1076 = vsyncpa %s1075, 1

</llo_original>
